<compile_context>
chip_gen: v7x
topology: tpu7x:2x2x1
jax: 0.10.0
libtpu: 0.0.40
codegen_flags: <defaults>
</compile_context>

<pallas_src>
import functools
import math

import jax
import jax.numpy as jnp
from jax.experimental import pallas as pl
from jax.experimental.pallas import tpu as pltpu


def _round_up(a, b):
    return (a + b - 1) // b * b


# ----------------------------------------------------------------------------
# Pallas kernel: fused Linear(+t-emb partial) -> ReLU -> Linear -> ReLU -> Linear
# ----------------------------------------------------------------------------
def mlp_kernel(xs_ref, tctx_ref,
               w1_ref, w2_ref, b2_ref, w3_ref, b3_ref, o_ref):
    xs = xs_ref[0]          # (tn, XS_PAD)  bf16   [x_t || seq_emb]
    tctx = tctx_ref[0]      # (1, H)        f32    t_emb @ W1_t + b1 (per-batch const)

    # Layer 1: (x||seq) partial matmul + hoisted timestep contribution.
    h1 = jnp.dot(xs, w1_ref[...], preferred_element_type=jnp.float32)
    h1 = jnp.maximum(h1 + tctx, 0.0)                              # (tn, H) f32

    h2 = jnp.dot(h1.astype(w2_ref.dtype), w2_ref[...],
                 preferred_element_type=jnp.float32)
    h2 = jnp.maximum(h2 + b2_ref[...], 0.0)                       # (tn, H) f32

    out = jnp.dot(h2.astype(w3_ref.dtype), w3_ref[...],
                  preferred_element_type=jnp.float32)
    o_ref[0] = (out + b3_ref[...]).astype(o_ref.dtype)            # (tn, 8) f32


# ----------------------------------------------------------------------------
# Wrapper: timestep embedding + t-contribution precompute + gridded pallas_call
# ----------------------------------------------------------------------------
def timestep_embedding(timesteps, dim=128, max_period=10000):
    half = dim // 2
    freqs = jnp.exp(
        -math.log(max_period) * jnp.arange(0, half, dtype=jnp.float32) / half
    )
    args = timesteps.astype(jnp.float32)[:, None] * freqs[None]
    embedding = jnp.concatenate([jnp.cos(args), jnp.sin(args)], axis=-1)
    if dim % 2:
        embedding = jnp.concatenate(
            [embedding, jnp.zeros_like(embedding[:, :1])], axis=-1
        )
    return embedding


def denoising_forward_pallas(kparams, x_t, t, sequence_embeddings, *,
                             t_emb_dim=128, output_dim=2,
                             compute_dtype=jnp.bfloat16):
    """x_t: (B, N, 2), t: (B,), sequence_embeddings: (B, N, E) -> (B, N, out)."""
    B, N, xf = x_t.shape
    E = sequence_embeddings.shape[-1]
    XS_PAD = kparams["w1_xs"].shape[0]
    H_PAD = kparams["w2"].shape[0]
    DOUT_PAD = kparams["w3"].shape[1]

    # Sequence tile: multiple of 16 (bf16 sublane packing), capped at 2048 —
    # per-step VMEM stays tiny on every generation including v7x.
    N16 = _round_up(N, 16)
    tn = min(N16, 2048)
    N_pad = _round_up(N16, tn)

    # Fused x||seq input stream (one dense bf16 DMA stream, one K=XS_PAD matmul).
    xs = jnp.concatenate(
        [x_t.astype(compute_dtype), sequence_embeddings.astype(compute_dtype)],
        axis=-1)
    xs_p = jnp.pad(xs, ((0, 0), (0, N_pad - N), (0, XS_PAD - (xf + E))))

    # Hoisted timestep contribution: (B, 128) @ (128, H) + b1, f32, per batch.
    t_emb = timestep_embedding(t, dim=t_emb_dim)                  # (B, 128) f32
    t_contrib = (t_emb @ kparams["w1_t"] + kparams["b1"]).reshape(B, 1, H_PAD)
    t_contrib = t_contrib.astype(jnp.float32)

    grid = (B, N_pad // tn)

    def resident(arr):
        nd = arr.ndim
        return pl.BlockSpec(arr.shape, lambda *_: (0,) * nd)

    in_specs = [
        pl.BlockSpec((1, tn, XS_PAD), lambda b, j: (b, j, 0)),
        pl.BlockSpec((1, 1, H_PAD), lambda b, j: (b, 0, 0)),
        resident(kparams["w1_xs"]),
        resident(kparams["w2"]), resident(kparams["b2"]),
        resident(kparams["w3"]), resident(kparams["b3"]),
    ]
    out_specs = pl.BlockSpec((1, tn, DOUT_PAD), lambda b, j: (b, j, 0))

    flops = 2 * B * N_pad * (XS_PAD * H_PAD + H_PAD * H_PAD + H_PAD * DOUT_PAD)
    param_bytes = sum(int(v.size) * v.dtype.itemsize for v in kparams.values())
    bytes_accessed = (int(xs_p.size) * xs_p.dtype.itemsize
                      + int(t_contrib.size) * t_contrib.dtype.itemsize
                      + param_bytes
                      + B * N_pad * DOUT_PAD * 4)

    out = pl.pallas_call(
        mlp_kernel,
        out_shape=jax.ShapeDtypeStruct((B, N_pad, DOUT_PAD), jnp.float32),
        grid=grid,
        in_specs=in_specs,
        out_specs=out_specs,
        compiler_params=pltpu.CompilerParams(
            dimension_semantics=("parallel", "parallel"),
            vmem_limit_bytes=32 * 1024 * 1024,
        ),
        cost_estimate=pl.CostEstimate(flops=int(flops), transcendentals=0,
                                      bytes_accessed=int(bytes_accessed)),
    )(xs_p, t_contrib,
      kparams["w1_xs"],
      kparams["w2"], kparams["b2"], kparams["w3"], kparams["b3"])

    return out[:, :N, :output_dim]


# ----------------------------------------------------------------------------
# Parameters: PyTorch nn.Linear-style init, then split/merge/pad for the kernel
# ----------------------------------------------------------------------------
def init_params(key, input_dim, hidden_dim, output_dim=2):
    ks = jax.random.split(key, 6)

    def linear(kw, kb, fan_in, fan_out):
        bound = 1.0 / math.sqrt(fan_in)
        w = jax.random.uniform(kw, (fan_in, fan_out), jnp.float32, -bound, bound)
        b = jax.random.uniform(kb, (1, fan_out), jnp.float32, -bound, bound)
        return w, b

    w1, b1 = linear(ks[0], ks[1], input_dim, hidden_dim)
    w2, b2 = linear(ks[2], ks[3], hidden_dim, hidden_dim)
    w3, b3 = linear(ks[4], ks[5], hidden_dim, output_dim)
    return {"w1": w1, "b1": b1, "w2": w2, "b2": b2, "w3": w3, "b3": b3}


def prepare_kernel_params(params, *, t_emb_dim=128, x_feat_dim=2,
                          compute_dtype=jnp.bfloat16):
    """Merge w1's x/seq rows, keep w1's t rows (f32) for the wrapper-side
    precompute, and zero-pad everything to kernel-friendly dims."""
    w1, b1 = params["w1"], params["b1"]
    din, hidden = w1.shape
    e_dim = din - x_feat_dim - t_emb_dim
    assert e_dim > 0
    h_pad = _round_up(hidden, 128)
    dout = params["w3"].shape[1]
    dout_pad = _round_up(dout, 8)          # narrow f32 output: 16x less writeback
    xs_pad = _round_up(x_feat_dim + e_dim, 16)

    def pad2(a, rows, cols):
        return jnp.pad(a, ((0, rows - a.shape[0]), (0, cols - a.shape[1])))

    cd = compute_dtype
    # Merged (x || seq) rows of w1, in the same order the wrapper concatenates.
    w1_xs = jnp.concatenate(
        [w1[:x_feat_dim], w1[x_feat_dim + t_emb_dim:]], axis=0)
    return {
        "w1_xs": pad2(w1_xs, xs_pad, h_pad).astype(cd),
        # Kept f32: consumed by the wrapper's per-batch t_contrib precompute.
        "w1_t": pad2(w1[x_feat_dim:x_feat_dim + t_emb_dim],
                     t_emb_dim, h_pad).astype(jnp.float32),
        "b1": pad2(b1, 1, h_pad).astype(jnp.float32),
        "w2": pad2(params["w2"], h_pad, h_pad).astype(cd),
        "b2": pad2(params["b2"], 1, h_pad).astype(jnp.float32),
        "w3": pad2(params["w3"], h_pad, dout_pad).astype(cd),
        "b3": pad2(params["b3"], 1, dout_pad).astype(jnp.float32),
    }


def reference_forward(params, x_t, t, sequence_embeddings, t_emb_dim=128):
    """Pure-JAX f32 reference matching the PyTorch module exactly."""
    B, N, _ = x_t.shape
    t_emb = timestep_embedding(t, dim=t_emb_dim)
    t_emb = jnp.broadcast_to(t_emb[:, None, :], (B, N, t_emb.shape[-1]))
    inp = jnp.concatenate([x_t, t_emb, sequence_embeddings], axis=-1)
    h1 = jax.nn.relu(inp @ params["w1"] + params["b1"])
    h2 = jax.nn.relu(h1 @ params["w2"] + params["b2"])
    return h2 @ params["w3"] + params["b3"]


# ----------------------------------------------------------------------------
if __name__ == "__main__":
    key = jax.random.PRNGKey(0)
    k_x, k_seq, k_t, k_p = jax.random.split(key, 4)

    B, N = 2, 8
    embedding_dim = 32
    hidden_dim = 64
    t_emb_dim = 128
    input_dim = 2 + t_emb_dim + embedding_dim   # coords + timestep emb + seq emb
    output_dim = 2

    x_t = jax.random.normal(k_x, (B, N, 2), dtype=jnp.float32)
    sequence_embeddings = jax.random.normal(
        k_seq, (B, N, embedding_dim), dtype=jnp.float32
    )
    t = jax.random.randint(k_t, (B,), 0, 1000)

    params = init_params(k_p, input_dim, hidden_dim, output_dim)
    kparams = prepare_kernel_params(params, t_emb_dim=t_emb_dim)

    fwd = jax.jit(functools.partial(denoising_forward_pallas,
                                    t_emb_dim=t_emb_dim,
                                    output_dim=output_dim))
    out = jax.block_until_ready(fwd(kparams, x_t, t, sequence_embeddings))

    assert out.shape == (B, N, output_dim)
    assert bool(jnp.all(jnp.isfinite(out)))

    # Loose tolerance: kernel uses bf16 MXU operands with f32 accumulation.
    ref = reference_forward(params, x_t, t, sequence_embeddings, t_emb_dim)
    max_err = float(jnp.max(jnp.abs(out - ref)))
    assert max_err < 1e-1, f"max abs err vs f32 reference: {max_err}"

    print("KERNEL_OK")
</pallas_src>

<mosaic_0001>
module attributes {stable_mosaic.version = 11 : i64} {
  func.func @mlp_kernel(%arg0: i32, %arg1: i32, %arg2: memref<1x16x48xbf16, #tpu.memory_space<vmem>>, %arg3: memref<1x1x128xf32, #tpu.memory_space<vmem>>, %arg4: memref<48x128xbf16, #tpu.memory_space<vmem>>, %arg5: memref<128x128xbf16, #tpu.memory_space<vmem>>, %arg6: memref<1x128xf32, #tpu.memory_space<vmem>>, %arg7: memref<128x8xbf16, #tpu.memory_space<vmem>>, %arg8: memref<1x8xf32, #tpu.memory_space<vmem>>, %arg9: memref<1x16x8xf32, #tpu.memory_space<vmem>>) attributes {dimension_semantics = [#tpu.dimension_semantics<parallel>, #tpu.dimension_semantics<parallel>], iteration_bounds = array<i64: 2, 1>, scalar_prefetch = 0 : i64, scratch_operands = 0 : i64, tpu.core_type = #tpu.core_type<tc>, window_params = [{transform_indices = @transform_0, window_bounds = array<i64: 1, 16, 48>}, {transform_indices = @transform_1, window_bounds = array<i64: 1, 1, 128>}, {pipeline_mode = #tpu.pipeline_mode<synchronous>, transform_indices = @transform_2, window_bounds = array<i64: 48, 128>}, {pipeline_mode = #tpu.pipeline_mode<synchronous>, transform_indices = @transform_3, window_bounds = array<i64: 128, 128>}, {pipeline_mode = #tpu.pipeline_mode<synchronous>, transform_indices = @transform_4, window_bounds = array<i64: 1, 128>}, {pipeline_mode = #tpu.pipeline_mode<synchronous>, transform_indices = @transform_5, window_bounds = array<i64: 128, 8>}, {pipeline_mode = #tpu.pipeline_mode<synchronous>, transform_indices = @transform_6, window_bounds = array<i64: 1, 8>}, {transform_indices = @transform_7, window_bounds = array<i64: 1, 16, 8>}]} {
    %c0 = arith.constant 0 : index
    %c0_0 = arith.constant 0 : index
    %c0_1 = arith.constant 0 : index
    %0 = vector.load %arg2[%c0, %c0_0, %c0_1] : memref<1x16x48xbf16, #tpu.memory_space<vmem>>, vector<1x16x48xbf16>
    %1 = vector.shape_cast %0 : vector<1x16x48xbf16> to vector<16x48xbf16>
    %c0_2 = arith.constant 0 : index
    %c0_3 = arith.constant 0 : index
    %c0_4 = arith.constant 0 : index
    %2 = vector.load %arg3[%c0_2, %c0_3, %c0_4] : memref<1x1x128xf32, #tpu.memory_space<vmem>>, vector<1x1x128xf32>
    %3 = vector.shape_cast %2 : vector<1x1x128xf32> to vector<1x128xf32>
    %c0_5 = arith.constant 0 : index
    %c0_6 = arith.constant 0 : index
    %4 = vector.load %arg4[%c0_5, %c0_6] : memref<48x128xbf16, #tpu.memory_space<vmem>>, vector<48x128xbf16>
    %cst = arith.constant dense<0.000000e+00> : vector<16x128xf32>
    %5 = tpu.matmul %1, %4, %cst {dimension_numbers = #tpu.dot_dimension_numbers<[1], [0], [0], [1], [0, 0, 1, 1], [], []>} : vector<16x48xbf16>, vector<48x128xbf16>, vector<16x128xf32> -> vector<16x128xf32>
    %6 = vector.broadcast %3 : vector<1x128xf32> to vector<16x128xf32>
    %7 = arith.addf %5, %6 : vector<16x128xf32>
    %cst_7 = arith.constant 0.000000e+00 : f32
    %8 = vector.broadcast %cst_7 : f32 to vector<16x128xf32>
    %9 = arith.maximumf %7, %8 : vector<16x128xf32>
    %10 = arith.truncf %9 : vector<16x128xf32> to vector<16x128xbf16>
    %c0_8 = arith.constant 0 : index
    %c0_9 = arith.constant 0 : index
    %11 = vector.load %arg5[%c0_8, %c0_9] : memref<128x128xbf16, #tpu.memory_space<vmem>>, vector<128x128xbf16>
    %cst_10 = arith.constant dense<0.000000e+00> : vector<16x128xf32>
    %12 = tpu.matmul %10, %11, %cst_10 {dimension_numbers = #tpu.dot_dimension_numbers<[1], [0], [0], [1], [0, 0, 1, 1], [], []>} : vector<16x128xbf16>, vector<128x128xbf16>, vector<16x128xf32> -> vector<16x128xf32>
    %c0_11 = arith.constant 0 : index
    %c0_12 = arith.constant 0 : index
    %13 = vector.load %arg6[%c0_11, %c0_12] : memref<1x128xf32, #tpu.memory_space<vmem>>, vector<1x128xf32>
    %14 = vector.broadcast %13 : vector<1x128xf32> to vector<16x128xf32>
    %15 = arith.addf %12, %14 : vector<16x128xf32>
    %cst_13 = arith.constant 0.000000e+00 : f32
    %16 = vector.broadcast %cst_13 : f32 to vector<16x128xf32>
    %17 = arith.maximumf %15, %16 : vector<16x128xf32>
    %18 = arith.truncf %17 : vector<16x128xf32> to vector<16x128xbf16>
    %c0_14 = arith.constant 0 : index
    %c0_15 = arith.constant 0 : index
    %19 = vector.load %arg7[%c0_14, %c0_15] : memref<128x8xbf16, #tpu.memory_space<vmem>>, vector<128x8xbf16>
    %cst_16 = arith.constant dense<0.000000e+00> : vector<16x8xf32>
    %20 = tpu.matmul %18, %19, %cst_16 {dimension_numbers = #tpu.dot_dimension_numbers<[1], [0], [0], [1], [0, 0, 1, 1], [], []>} : vector<16x128xbf16>, vector<128x8xbf16>, vector<16x8xf32> -> vector<16x8xf32>
    %c0_17 = arith.constant 0 : index
    %c0_18 = arith.constant 0 : index
    %21 = vector.load %arg8[%c0_17, %c0_18] : memref<1x8xf32, #tpu.memory_space<vmem>>, vector<1x8xf32>
    %22 = vector.broadcast %21 : vector<1x8xf32> to vector<16x8xf32>
    %23 = arith.addf %20, %22 : vector<16x8xf32>
    %c0_19 = arith.constant 0 : index
    %c0_20 = arith.constant 0 : index
    %c0_21 = arith.constant 0 : index
    %24 = vector.load %arg9[%c0_19, %c0_20, %c0_21] : memref<1x16x8xf32, #tpu.memory_space<vmem>>, vector<1x16x8xf32>
    %25 = vector.shape_cast %24 : vector<1x16x8xf32> to vector<16x8xf32>
    %26 = vector.shape_cast %23 : vector<16x8xf32> to vector<1x16x8xf32>
    tpu.vector_store %arg9[%c0_19, %c0_20, %c0_21], %26 {strides = array<i32>} : memref<1x16x8xf32, #tpu.memory_space<vmem>>, vector<1x16x8xf32>,
    return
  }
  func.func @transform_0(%arg0: i32, %arg1: i32) -> (i32, i32, i32) {
    %c0_i32 = arith.constant 0 : i32
    %c0_i32_0 = arith.constant 0 : i32
    return %arg0, %arg1, %c0_i32 : i32, i32, i32
  }
  func.func @transform_1(%arg0: i32, %arg1: i32) -> (i32, i32, i32) {
    %c0_i32 = arith.constant 0 : i32
    %c0_i32_0 = arith.constant 0 : i32
    %c0_i32_1 = arith.constant 0 : i32
    return %arg0, %c0_i32, %c0_i32_0 : i32, i32, i32
  }
  func.func @transform_2(%arg0: i32, %arg1: i32) -> (i32, i32) {
    %c0_i32 = arith.constant 0 : i32
    %c0_i32_0 = arith.constant 0 : i32
    %c0_i32_1 = arith.constant 0 : i32
    return %c0_i32, %c0_i32_0 : i32, i32
  }
  func.func @transform_3(%arg0: i32, %arg1: i32) -> (i32, i32) {
    %c0_i32 = arith.constant 0 : i32
    %c0_i32_0 = arith.constant 0 : i32
    %c0_i32_1 = arith.constant 0 : i32
    return %c0_i32, %c0_i32_0 : i32, i32
  }
  func.func @transform_4(%arg0: i32, %arg1: i32) -> (i32, i32) {
    %c0_i32 = arith.constant 0 : i32
    %c0_i32_0 = arith.constant 0 : i32
    %c0_i32_1 = arith.constant 0 : i32
    return %c0_i32, %c0_i32_0 : i32, i32
  }
  func.func @transform_5(%arg0: i32, %arg1: i32) -> (i32, i32) {
    %c0_i32 = arith.constant 0 : i32
    %c0_i32_0 = arith.constant 0 : i32
    %c0_i32_1 = arith.constant 0 : i32
    return %c0_i32, %c0_i32_0 : i32, i32
  }
  func.func @transform_6(%arg0: i32, %arg1: i32) -> (i32, i32) {
    %c0_i32 = arith.constant 0 : i32
    %c0_i32_0 = arith.constant 0 : i32
    %c0_i32_1 = arith.constant 0 : i32
    return %c0_i32, %c0_i32_0 : i32, i32
  }
  func.func @transform_7(%arg0: i32, %arg1: i32) -> (i32, i32, i32) {
    %c0_i32 = arith.constant 0 : i32
    %c0_i32_0 = arith.constant 0 : i32
    return %arg0, %arg1, %c0_i32 : i32, i32, i32
  }
}

</mosaic_0001>

<llo_original>
// kernel: denoising_forward_pallas.1
$region0: #{denoising_forward_pallas.1}
  #allocation0 [shape = 'u32[]', space=smem, size = 0x4, offset = 0x4, fixed_abs, tag = 'smem constant byte address 0x4 - core index']
  #allocation1 [shape = 'u32[144,128]{1,0:T(1,128)}', space=vmem, size = 0x12000, scoped, tag = 'internal scratch']
  %s0 = inlined_call_operand.vmem [shape: bf16[2,16,48], index: 0, kind: input, shape index: {}]
  %s1 = inlined_call_operand.vmem [shape: f32[2,1,128], index: 1, kind: input, shape index: {}]
  %s2 = inlined_call_operand.vmem [shape: bf16[48,128], index: 2, kind: input, shape index: {}]
  %s3 = inlined_call_operand.vmem [shape: bf16[128,128], index: 3, kind: input, shape index: {}]
  %s4 = inlined_call_operand.vmem [shape: f32[1,128], index: 4, kind: input, shape index: {}]
  %s5 = inlined_call_operand.vmem [shape: bf16[128,8], index: 5, kind: input, shape index: {}]
  %s6 = inlined_call_operand.vmem [shape: f32[1,8], index: 6, kind: input, shape index: {}]
  %s7 = inlined_call_operand.vmem [shape: f32[2,16,8], index: 7, kind: output, shape index: {}]
  %s8 = sld [smem:[#allocation0]]
  $region61: #{denoising_forward_pallas.1} parent=0
    _
  %s10 = ssub.s32 1, %s8
  %s11 = scalar_select 0, %s10, %s8
  loop: start=0, step=1, limit=4
  $region2: #{denoising_forward_pallas.1} parent=0 // loop_pre_header
    _
  $region3: #{denoising_forward_pallas.1} parent=0 // loop_header
    %s13 = sphi 0, %s17
    %p14 = scmp.ge.s32.totalorder %s13, 4
    %s20 = sphi 0, %s32
    %s21 = sphi 0, %s28
    %s22 = sphi 0, %s20
    %s23 = sphi 0, %s21
    %s24 = sphi 0, %s22
    %s25 = sphi 0, %s23
    %s37 = sphi 0, %s39
    %s40 = sphi 0, %s37
    %s41 = sphi 0, %s40
    %s57 = sphi 0, %s41
    %s63 = sphi 0, %s65
    %s66 = sphi 0, %s63
    %s67 = sphi 0, %s66
    %s83 = sphi 0, %s67
    %s87 = sphi 0, %s87
    %s89 = sphi 0, %s87
    %s90 = sphi 0, %s89
    %s104 = sphi 0, %s90
    %s108 = sphi 0, %s108
    %s110 = sphi 0, %s108
    %s111 = sphi 0, %s110
    %s125 = sphi 0, %s111
    %s129 = sphi 0, %s129
    %s131 = sphi 0, %s129
    %s132 = sphi 0, %s131
    %s146 = sphi 0, %s132
    %s150 = sphi 0, %s150
    %s152 = sphi 0, %s150
    %s153 = sphi 0, %s152
    %s167 = sphi 0, %s153
    %s171 = sphi 0, %s171
    %s173 = sphi 0, %s171
    %s174 = sphi 0, %s173
    %s188 = sphi 0, %s174
    %s196 = sphi 0, %s198
    %s199 = sphi 0, %s196
    %s200 = sphi 0, %s199
    %s216 = sphi 0, %s200
  $region4: #{denoising_forward_pallas.1} parent=0 // loop_header_branch
    %16 = sbr.rel (%p14) target = $region8
  $region5: #{denoising_forward_pallas.1} parent=0 // loop_body
    %s18 = ssub.s32 %s13, 1
    %s19 = ssub.s32 %s13, 2
    %s26 = sadd.s32 1, %s21
    %p27 = scmp.ge.s32.totalorder %s26, 1
    %s28 = scalar_select %p27, 0, %s26
    %s29 = sadd.s32 1, %s20
    %s30 = scalar_select %p27, %s29, %s20
    %p31 = scmp.ge.s32.totalorder %s30, 2
    %s32 = scalar_select %p31, 0, %s30
    %s33 = ssub.s32 %s20, %s32
    %s34 = ssub.s32 %s21, %s28
    %s35 = sor.u32 %s33, %s34
    %p36 = scmp.eq.s32.totalorder %s35, 0
    %s38 = sadd.s32 %s37, 1
    %s39 = scalar_select %p36, %s37, %s38
    %p42 = pneg %p36
    %p43 = scmp.eq.s32.totalorder %s13, 1
    %p44 = por %p42, %p43
    %p45 = scmp.ne.s32.totalorder %s37, %s40
    %p46 = scmp.eq.s32.totalorder %s13, 0
    %p47 = por %p45, %p46
    %p48 = scmp.ne.s32.totalorder %s37, %s40
    %p49 = scmp.eq.s32.totalorder %s18, 1
    %p50 = por %p48, %p49
    %p51 = scmp.ne.s32.totalorder %s40, %s41
    %p52 = scmp.eq.s32.totalorder %s18, 0
    %p53 = por %p51, %p52
    %p54 = scmp.ne.s32.totalorder %s40, %s41
    %p55 = scmp.eq.s32.totalorder %s19, 1
    %p56 = por %p54, %p55
    %p58 = scmp.ne.s32.totalorder %s41, %s57
    %p59 = scmp.eq.s32.totalorder %s19, 0
    %p60 = por %p58, %p59
    %s61 = ssub.s32 %s20, %s32
    %p62 = scmp.eq.s32.totalorder %s61, 0
    %s64 = sadd.s32 %s63, 1
    %s65 = scalar_select %p62, %s63, %s64
    %p68 = pneg %p62
    %p69 = scmp.eq.s32.totalorder %s13, 1
    %p70 = por %p68, %p69
    %p71 = scmp.ne.s32.totalorder %s63, %s66
    %p72 = scmp.eq.s32.totalorder %s13, 0
    %p73 = por %p71, %p72
    %p74 = scmp.ne.s32.totalorder %s63, %s66
    %p75 = scmp.eq.s32.totalorder %s18, 1
    %p76 = por %p74, %p75
    %p77 = scmp.ne.s32.totalorder %s66, %s67
    %p78 = scmp.eq.s32.totalorder %s18, 0
    %p79 = por %p77, %p78
    %p80 = scmp.ne.s32.totalorder %s66, %s67
    %p81 = scmp.eq.s32.totalorder %s19, 1
    %p82 = por %p80, %p81
    %p84 = scmp.ne.s32.totalorder %s67, %s83
    %p85 = scmp.eq.s32.totalorder %s19, 0
    %p86 = por %p84, %p85
    %s88 = sadd.s32 %s87, 1
    %p91 = scmp.eq.s32.totalorder %s13, 1
    %p92 = scmp.ne.s32.totalorder %s87, %s89
    %p93 = scmp.eq.s32.totalorder %s13, 0
    %p94 = por %p92, %p93
    %p95 = scmp.ne.s32.totalorder %s87, %s89
    %p96 = scmp.eq.s32.totalorder %s18, 1
    %p97 = por %p95, %p96
    %p98 = scmp.ne.s32.totalorder %s89, %s90
    %p99 = scmp.eq.s32.totalorder %s18, 0
    %p100 = por %p98, %p99
    %p101 = scmp.ne.s32.totalorder %s89, %s90
    %p102 = scmp.eq.s32.totalorder %s19, 1
    %p103 = por %p101, %p102
    %p105 = scmp.ne.s32.totalorder %s90, %s104
    %p106 = scmp.eq.s32.totalorder %s19, 0
    %p107 = por %p105, %p106
    %s109 = sadd.s32 %s108, 1
    %p112 = scmp.eq.s32.totalorder %s13, 1
    %p113 = scmp.ne.s32.totalorder %s108, %s110
    %p114 = scmp.eq.s32.totalorder %s13, 0
    %p115 = por %p113, %p114
    %p116 = scmp.ne.s32.totalorder %s108, %s110
    %p117 = scmp.eq.s32.totalorder %s18, 1
    %p118 = por %p116, %p117
    %p119 = scmp.ne.s32.totalorder %s110, %s111
    %p120 = scmp.eq.s32.totalorder %s18, 0
    %p121 = por %p119, %p120
    %p122 = scmp.ne.s32.totalorder %s110, %s111
    %p123 = scmp.eq.s32.totalorder %s19, 1
    %p124 = por %p122, %p123
    %p126 = scmp.ne.s32.totalorder %s111, %s125
    %p127 = scmp.eq.s32.totalorder %s19, 0
    %p128 = por %p126, %p127
    %s130 = sadd.s32 %s129, 1
    %p133 = scmp.eq.s32.totalorder %s13, 1
    %p134 = scmp.ne.s32.totalorder %s129, %s131
    %p135 = scmp.eq.s32.totalorder %s13, 0
    %p136 = por %p134, %p135
    %p137 = scmp.ne.s32.totalorder %s129, %s131
    %p138 = scmp.eq.s32.totalorder %s18, 1
    %p139 = por %p137, %p138
    %p140 = scmp.ne.s32.totalorder %s131, %s132
    %p141 = scmp.eq.s32.totalorder %s18, 0
    %p142 = por %p140, %p141
    %p143 = scmp.ne.s32.totalorder %s131, %s132
    %p144 = scmp.eq.s32.totalorder %s19, 1
    %p145 = por %p143, %p144
    %p147 = scmp.ne.s32.totalorder %s132, %s146
    %p148 = scmp.eq.s32.totalorder %s19, 0
    %p149 = por %p147, %p148
    %s151 = sadd.s32 %s150, 1
    %p154 = scmp.eq.s32.totalorder %s13, 1
    %p155 = scmp.ne.s32.totalorder %s150, %s152
    %p156 = scmp.eq.s32.totalorder %s13, 0
    %p157 = por %p155, %p156
    %p158 = scmp.ne.s32.totalorder %s150, %s152
    %p159 = scmp.eq.s32.totalorder %s18, 1
    %p160 = por %p158, %p159
    %p161 = scmp.ne.s32.totalorder %s152, %s153
    %p162 = scmp.eq.s32.totalorder %s18, 0
    %p163 = por %p161, %p162
    %p164 = scmp.ne.s32.totalorder %s152, %s153
    %p165 = scmp.eq.s32.totalorder %s19, 1
    %p166 = por %p164, %p165
    %p168 = scmp.ne.s32.totalorder %s153, %s167
    %p169 = scmp.eq.s32.totalorder %s19, 0
    %p170 = por %p168, %p169
    %s172 = sadd.s32 %s171, 1
    %p175 = scmp.eq.s32.totalorder %s13, 1
    %p176 = scmp.ne.s32.totalorder %s171, %s173
    %p177 = scmp.eq.s32.totalorder %s13, 0
    %p178 = por %p176, %p177
    %p179 = scmp.ne.s32.totalorder %s171, %s173
    %p180 = scmp.eq.s32.totalorder %s18, 1
    %p181 = por %p179, %p180
    %p182 = scmp.ne.s32.totalorder %s173, %s174
    %p183 = scmp.eq.s32.totalorder %s18, 0
    %p184 = por %p182, %p183
    %p185 = scmp.ne.s32.totalorder %s173, %s174
    %p186 = scmp.eq.s32.totalorder %s19, 1
    %p187 = por %p185, %p186
    %p189 = scmp.ne.s32.totalorder %s174, %s188
    %p190 = scmp.eq.s32.totalorder %s19, 0
    %p191 = por %p189, %p190
    %s192 = ssub.s32 %s20, %s32
    %s193 = ssub.s32 %s21, %s28
    %s194 = sor.u32 %s192, %s193
    %p195 = scmp.eq.s32.totalorder %s194, 0
    %s197 = sadd.s32 %s196, 1
    %s198 = scalar_select %p195, %s196, %s197
    %p201 = pneg %p195
    %p202 = scmp.eq.s32.totalorder %s13, 1
    %p203 = por %p201, %p202
    %p204 = scmp.ne.s32.totalorder %s196, %s199
    %p205 = scmp.eq.s32.totalorder %s13, 0
    %p206 = por %p204, %p205
    %p207 = scmp.ne.s32.totalorder %s196, %s199
    %p208 = scmp.eq.s32.totalorder %s18, 1
    %p209 = por %p207, %p208
    %p210 = scmp.ne.s32.totalorder %s199, %s200
    %p211 = scmp.eq.s32.totalorder %s18, 0
    %p212 = por %p210, %p211
    %p213 = scmp.ne.s32.totalorder %s199, %s200
    %p214 = scmp.eq.s32.totalorder %s19, 1
    %p215 = por %p213, %p214
    %p217 = scmp.ne.s32.totalorder %s200, %s216
    %p218 = scmp.eq.s32.totalorder %s19, 0
    %p219 = por %p217, %p218
    %p220 = scmp.le.s32.totalorder 1, %s13
    %p221 = scmp.lt.s32.totalorder %s13, 3
    %p222 = pnand %p220, %p221
    %p223 = pneg %p222
    // Predicated region
    $region9: #{denoising_forward_pallas.1} parent=5 // pred_check
      _
    $region10: #{denoising_forward_pallas.1} parent=5 // pred_check_branch
      %225 = sbr.rel (%p222) target = $region12
    $region11: #{denoising_forward_pallas.1} parent=5 // pred_region
      %s226 = ssub.s32 %s13, 1
      // Predicated region
      $region13: #{denoising_forward_pallas.1} parent=11 // pred_check
        %p227 = pneg %p100
      $region14: #{denoising_forward_pallas.1} parent=11 // pred_check_branch
        %229 = sbr.rel (%p227) target = $region16
      $region15: #{denoising_forward_pallas.1} parent=11 // pred_region
        _
      $region16: #{denoising_forward_pallas.1} parent=11 // pred_fallthru
        _
      // Predicated region
      $region17: #{denoising_forward_pallas.1} parent=11 // pred_check
        %p230 = pneg %p121
      $region18: #{denoising_forward_pallas.1} parent=11 // pred_check_branch
        %232 = sbr.rel (%p230) target = $region20
      $region19: #{denoising_forward_pallas.1} parent=11 // pred_region
        _
      $region20: #{denoising_forward_pallas.1} parent=11 // pred_fallthru
        _
      // Predicated region
      $region21: #{denoising_forward_pallas.1} parent=11 // pred_check
        %p233 = pneg %p142
      $region22: #{denoising_forward_pallas.1} parent=11 // pred_check_branch
        %235 = sbr.rel (%p233) target = $region24
      $region23: #{denoising_forward_pallas.1} parent=11 // pred_region
        _
      $region24: #{denoising_forward_pallas.1} parent=11 // pred_fallthru
        _
      // Predicated region
      $region25: #{denoising_forward_pallas.1} parent=11 // pred_check
        %p236 = pneg %p163
      $region26: #{denoising_forward_pallas.1} parent=11 // pred_check_branch
        %238 = sbr.rel (%p236) target = $region28
      $region27: #{denoising_forward_pallas.1} parent=11 // pred_region
        _
      $region28: #{denoising_forward_pallas.1} parent=11 // pred_fallthru
        _
      // Predicated region
      $region29: #{denoising_forward_pallas.1} parent=11 // pred_check
        %p239 = pneg %p184
      $region30: #{denoising_forward_pallas.1} parent=11 // pred_check_branch
        %241 = sbr.rel (%p239) target = $region32
      $region31: #{denoising_forward_pallas.1} parent=11 // pred_region
        _
      $region32: #{denoising_forward_pallas.1} parent=11 // pred_fallthru
        _
    $region12: #{denoising_forward_pallas.1} parent=5 // pred_fallthru
      _
    %p242 = scmp.lt.s32.totalorder %s13, 2
    // Predicated region
    $region33: #{denoising_forward_pallas.1} parent=5 // pred_check
      %p243 = pneg %p242
    $region34: #{denoising_forward_pallas.1} parent=5 // pred_check_branch
      %245 = sbr.rel (%p243) target = $region36
    $region35: #{denoising_forward_pallas.1} parent=5 // pred_region
      // Predicated region
      $region37: #{denoising_forward_pallas.1} parent=35 // pred_check
        %p246 = pneg %p47
      $region38: #{denoising_forward_pallas.1} parent=35 // pred_check_branch
        %248 = sbr.rel (%p246) target = $region40
      $region39: #{denoising_forward_pallas.1} parent=35 // pred_region
        %s249 = smul.u32 2, %s21
        %p250 = scmp.lt.s32.totalorder %s20, 1
        %s251 = scalar_select %p250, %s20, 1
        %p252 = scmp.lt.s32.totalorder %s249, 1
        %s253 = scalar_select %p252, %s249, 1
        %s254 = smul.addr %s251, 2
        %s255 = sadd.s32 %s253, %s254
        %s256 = smul.addr %s255, 4
        %s257 = scalar_lea.vmem %s0, %s256
        %s258 = smul.u32 2, %s21
      $region40: #{denoising_forward_pallas.1} parent=35 // pred_fallthru
        _
      // Predicated region
      $region41: #{denoising_forward_pallas.1} parent=35 // pred_check
        %p259 = pneg %p73
      $region42: #{denoising_forward_pallas.1} parent=35 // pred_check_branch
        %261 = sbr.rel (%p259) target = $region44
      $region43: #{denoising_forward_pallas.1} parent=35 // pred_region
        %p262 = scmp.lt.s32.totalorder %s20, 1
        %s263 = scalar_select %p262, %s20, 1
        %s264 = scalar_lea.vmem %s1, %s263
      $region44: #{denoising_forward_pallas.1} parent=35 // pred_fallthru
        _
    $region36: #{denoising_forward_pallas.1} parent=5 // pred_fallthru
      _
    %p265 = scmp.le.s32.totalorder 1, %s13
    %p266 = scmp.lt.s32.totalorder %s13, 3
    %p267 = pnand %p265, %p266
    %p268 = pneg %p267
    // Predicated region
    $region45: #{denoising_forward_pallas.1} parent=5 // pred_check
      _
    $region46: #{denoising_forward_pallas.1} parent=5 // pred_check_branch
      %270 = sbr.rel (%p267) target = $region48
    $region47: #{denoising_forward_pallas.1} parent=5 // pred_region
      %s271 = ssub.s32 %s13, 1
      %s272 = smul.u32 2, %s23
      %p273 = scmp.lt.s32.totalorder %s22, 1
      %s274 = scalar_select %p273, %s22, 1
      %p275 = scmp.lt.s32.totalorder %s272, 1
      %s276 = scalar_select %p275, %s272, 1
      %s277 = smul.addr %s274, 2
      %s278 = sadd.s32 %s276, %s277
      %s279 = smul.addr %s278, 4
      %s280 = scalar_lea.vmem %s0, %s279
      %p281 = pneg %p53
      %p282 = pneg %p50
      %p283 = scmp.lt.s32.totalorder %s22, 1
      %s284 = scalar_select %p283, %s22, 1
      %s285 = scalar_lea.vmem %s1, %s284
      %p286 = pneg %p79
      %p287 = pneg %p76
      %p288 = pneg %p100
      %p289 = pneg %p97
      %p290 = pneg %p121
      %p291 = pneg %p118
      %p292 = pneg %p142
      %p293 = pneg %p139
      %p294 = pneg %p163
      %p295 = pneg %p160
      %p296 = pneg %p184
      %p297 = pneg %p181
      %p298 = pneg %p212
      %p299 = pneg %p209
      %s300 = smul.u32 2, %s23
      %p301 = scmp.lt.s32.totalorder %s22, 1
      %s302 = scalar_select %p301, %s22, 1
      %p303 = scmp.lt.s32.totalorder %s300, 1
      %s304 = scalar_select %p303, %s300, 1
      %s305 = smul.addr %s302, 2
      %s306 = sadd.s32 %s304, %s305
      %s307 = smul.addr %s306, 8
      %s308 = scalar_lea.vmem %s7, %s307
      %s309 = smul.u32 2, %s23
      %p310 = scmp.lt.s32.totalorder %s22, 1
      %s311 = scalar_select %p310, %s22, 1
      %p312 = scmp.lt.s32.totalorder %s309, 1
      %s313 = scalar_select %p312, %s309, 1
      %s314 = smul.addr %s311, 2
      %s315 = sadd.s32 %s313, %s314
      %s316 = smul.addr %s315, 4
      %s317 = scalar_lea.vmem %s0, %s316
      %s318 = smul.u32 2, %s23
      %p319 = scmp.lt.s32.totalorder %s22, 1
      %s320 = scalar_select %p319, %s22, 1
      %s321 = scalar_lea.vmem %s1, %s320
      %s322 = smul.u32 2, %s23
      %p323 = scmp.lt.s32.totalorder %s22, 1
      %s324 = scalar_select %p323, %s22, 1
      %p325 = scmp.lt.s32.totalorder %s322, 1
      %s326 = scalar_select %p325, %s322, 1
      %s327 = smul.addr %s324, 2
      %s328 = sadd.s32 %s326, %s327
      %s329 = smul.addr %s328, 8
      %s330 = scalar_lea.vmem %s7, %s329
      %s331 = smul.u32 2, %s23
      %v333 = vld [vmem:[%s317] sm:$0xf]
      %v334 = vld [vmem:[%s317 + $0x4] sm:$0xf]
      %v335 = vld [vmem:[%s321] sm:$0x1]
      %v336 = vld [vmem:[%s2] sm:$0xf]
      %v337 = vld [vmem:[%s2 + $0x4] sm:$0xf]
      %v338 = vld [vmem:[%s2 + $0x8] sm:$0xf]
      %v339 = vld [vmem:[%s2 + $0xc] sm:$0xf]
      %v340 = vld [vmem:[%s2 + $0x10] sm:$0xf]
      %v341 = vld [vmem:[%s2 + $0x14] sm:$0xf]
      %v343 = vlaneseq
      %v344 = vshrl.u32 %v343, 7
      %v345 = vsub.s32 0, %v344
      %v346 = vrot.slane %v335, %v345
      %v350 = vunpack.c.l.b16 %v333
      %v351 = vunpack.c.l.b16 %v334
      %v352 = vpack.c.b16 %v351, %v350
      %v359 = vunpack.c.l.b16 %v336
      %v360 = vunpack.c.l.b16 %v337
      %v361 = vunpack.c.l.b16 %v338
      %v362 = vunpack.c.l.b16 %v339
      %v363 = vunpack.c.l.b16 %v340
      %v364 = vunpack.c.l.b16 %v341
      %v365 = vpack.c.b16 %v360, %v359
      %v366 = vpack.c.b16 %v362, %v361
      %v367 = vpack.c.b16 %v364, %v363
      %vm371 = vcmask 392192
      %v373 = vsel %vm371, %v352, 0
      %375 = vmatprep.subr.bf16.mxu0 0
      %376 = vmatpush1.bf16.msra.mxu0 %v365
      %377 = vmatprep.subr.bf16.mxu0 0
      %378 = vmatpush1.bf16.msra.mxu0 %v366
      %379 = vmatprep.subr.bf16.mxu0 0
      %380 = vmatpush1.bf16.msra.mxu0 %v367
      %381 = vmatprep.subr.bf16.mxu0 0
      %382 = vmatpush1.bf16.msra.mxu0 0
      %383 = vmatprep.subr.bf16.mxu0 0
      %384 = vmatpush1.bf16.msra.mxu0 0
      %385 = vmatprep.subr.bf16.mxu0 0
      %386 = vmatpush1.bf16.msra.mxu0 0
      %387 = vmatprep.subr.bf16.mxu0 0
      %388 = vmatpush1.bf16.msra.mxu0 0
      %389 = vmatprep.subr.bf16.mxu0 0
      %390 = vmatpush1.bf16.msra.mxu0 0
      %391 = vmatprep.subr.bf16.mxu0 0
      %392 = vmatpush1.bf16.msra.mxu0 0
      %393 = vmatprep.subr.bf16.mxu0 0
      %394 = vmatpush1.bf16.msra.mxu0 0
      %395 = vmatprep.subr.bf16.mxu0 0
      %396 = vmatpush1.bf16.msra.mxu0 0
      %397 = vmatprep.subr.bf16.mxu0 0
      %398 = vmatpush1.bf16.msra.mxu0 0
      %399 = vmatprep.subr.bf16.mxu0 0
      %400 = vmatpush1.bf16.msra.mxu0 0
      %401 = vmatprep.subr.bf16.mxu0 0
      %402 = vmatpush1.bf16.msra.mxu0 0
      %403 = vmatprep.subr.bf16.mxu0 0
      %404 = vmatpush1.bf16.msra.mxu0 0
      %405 = vmatprep.subr.bf16.mxu0 0
      %406 = vmatpush1.bf16.msra.mxu0 0
      %407 = vmatprep.mubr.bf16.mxu0 0
      %408 = vmatmul.mubr.bf16.gmra.mrb[0].mxu0 %v373
      %v409 = vpop.f32.mrb[0].mxu0
      %v410 = vadd.f32 %v346, %v409
      %v411 = vpop.f32.mrb[0].mxu0
      %v412 = vpop.f32.mrb[0].mxu0
      %v413 = vadd.f32 %v346, %v412
      %v414 = vpop.f32.mrb[0].mxu0
      %415 = vdwg.mxu0
      %v416 = vmax.f32 %v410, 0.0
      %v417 = vmax.f32 %v413, 0.0
      %v418 = vpack.c.bf16 %v417, %v416
      %v419 = vld [vmem:[%s3] sm:$0xf]
      %v420 = vld [vmem:[%s3 + $0x4] sm:$0xf]
      %v421 = vld [vmem:[%s3 + $0x8] sm:$0xf]
      %v422 = vld [vmem:[%s3 + $0xc] sm:$0xf]
      %v423 = vld [vmem:[%s3 + $0x10] sm:$0xf]
      %v424 = vld [vmem:[%s3 + $0x14] sm:$0xf]
      %v425 = vld [vmem:[%s3 + $0x18] sm:$0xf]
      %v426 = vld [vmem:[%s3 + $0x1c] sm:$0xf]
      %v427 = vld [vmem:[%s3 + $0x20] sm:$0xf]
      %v428 = vld [vmem:[%s3 + $0x24] sm:$0xf]
      %v429 = vld [vmem:[%s3 + $0x28] sm:$0xf]
      %v430 = vld [vmem:[%s3 + $0x2c] sm:$0xf]
      %v431 = vld [vmem:[%s3 + $0x30] sm:$0xf]
      %v432 = vld [vmem:[%s3 + $0x34] sm:$0xf]
      %v433 = vld [vmem:[%s3 + $0x38] sm:$0xf]
      %v434 = vld [vmem:[%s3 + $0x3c] sm:$0xf]
      %v435 = vld [vmem:[%s4] sm:$0x1]
      %v437 = vlaneseq
      %v438 = vshrl.u32 %v437, 7
      %v439 = vsub.s32 0, %v438
      %v440 = vrot.slane %v435, %v439
      %v458 = vunpack.c.l.b16 %v419
      %v459 = vunpack.c.l.b16 %v420
      %v460 = vunpack.c.l.b16 %v421
      %v461 = vunpack.c.l.b16 %v422
      %v462 = vunpack.c.l.b16 %v423
      %v463 = vunpack.c.l.b16 %v424
      %v464 = vunpack.c.l.b16 %v425
      %v465 = vunpack.c.l.b16 %v426
      %v466 = vunpack.c.l.b16 %v427
      %v467 = vunpack.c.l.b16 %v428
      %v468 = vunpack.c.l.b16 %v429
      %v469 = vunpack.c.l.b16 %v430
      %v470 = vunpack.c.l.b16 %v431
      %v471 = vunpack.c.l.b16 %v432
      %v472 = vunpack.c.l.b16 %v433
      %v473 = vunpack.c.l.b16 %v434
      %v474 = vpack.c.b16 %v459, %v458
      %v475 = vpack.c.b16 %v461, %v460
      %v476 = vpack.c.b16 %v463, %v462
      %v477 = vpack.c.b16 %v465, %v464
      %v478 = vpack.c.b16 %v467, %v466
      %v479 = vpack.c.b16 %v469, %v468
      %v480 = vpack.c.b16 %v471, %v470
      %v481 = vpack.c.b16 %v473, %v472
      %490 = vmatprep.subr.bf16.mxu0 0
      %491 = vmatpush1.bf16.msra.mxu0 %v474
      %492 = vmatprep.subr.bf16.mxu0 0
      %493 = vmatpush1.bf16.msra.mxu0 %v475
      %494 = vmatprep.subr.bf16.mxu0 0
      %495 = vmatpush1.bf16.msra.mxu0 %v476
      %496 = vmatprep.subr.bf16.mxu0 0
      %497 = vmatpush1.bf16.msra.mxu0 %v477
      %498 = vmatprep.subr.bf16.mxu0 0
      %499 = vmatpush1.bf16.msra.mxu0 %v478
      %500 = vmatprep.subr.bf16.mxu0 0
      %501 = vmatpush1.bf16.msra.mxu0 %v479
      %502 = vmatprep.subr.bf16.mxu0 0
      %503 = vmatpush1.bf16.msra.mxu0 %v480
      %504 = vmatprep.subr.bf16.mxu0 0
      %505 = vmatpush1.bf16.msra.mxu0 %v481
      %506 = vmatprep.subr.bf16.mxu0 0
      %507 = vmatpush1.bf16.msra.mxu0 0
      %508 = vmatprep.subr.bf16.mxu0 0
      %509 = vmatpush1.bf16.msra.mxu0 0
      %510 = vmatprep.subr.bf16.mxu0 0
      %511 = vmatpush1.bf16.msra.mxu0 0
      %512 = vmatprep.subr.bf16.mxu0 0
      %513 = vmatpush1.bf16.msra.mxu0 0
      %514 = vmatprep.subr.bf16.mxu0 0
      %515 = vmatpush1.bf16.msra.mxu0 0
      %516 = vmatprep.subr.bf16.mxu0 0
      %517 = vmatpush1.bf16.msra.mxu0 0
      %518 = vmatprep.subr.bf16.mxu0 0
      %519 = vmatpush1.bf16.msra.mxu0 0
      %520 = vmatprep.subr.bf16.mxu0 0
      %521 = vmatpush1.bf16.msra.mxu0 0
      %522 = vmatprep.mubr.bf16.mxu0 0
      %523 = vmatmul.mubr.bf16.gmra.mrb[0].mxu0 %v418
      %v524 = vpop.f32.mrb[0].mxu0
      %v525 = vadd.f32 %v440, %v524
      %v526 = vpop.f32.mrb[0].mxu0
      %v527 = vpop.f32.mrb[0].mxu0
      %v528 = vadd.f32 %v440, %v527
      %v529 = vpop.f32.mrb[0].mxu0
      %530 = vdwg.mxu0
      %v531 = vmax.f32 %v525, 0.0
      %v532 = vmax.f32 %v528, 0.0
      %v533 = vpack.c.bf16 %v532, %v531
      %v534 = vld [vmem:[%s5] sm:$0xf]
      %v535 = vld [vmem:[%s5 + $0x4] sm:$0xf]
      %v536 = vld [vmem:[%s5 + $0x8] sm:$0xf]
      %v537 = vld [vmem:[%s5 + $0xc] sm:$0xf]
      %v538 = vld [vmem:[%s5 + $0x10] sm:$0xf]
      %v539 = vld [vmem:[%s5 + $0x14] sm:$0xf]
      %v540 = vld [vmem:[%s5 + $0x18] sm:$0xf]
      %v541 = vld [vmem:[%s5 + $0x1c] sm:$0xf]
      %v542 = vld [vmem:[%s5 + $0x20] sm:$0xf]
      %v543 = vld [vmem:[%s5 + $0x24] sm:$0xf]
      %v544 = vld [vmem:[%s5 + $0x28] sm:$0xf]
      %v545 = vld [vmem:[%s5 + $0x2c] sm:$0xf]
      %v546 = vld [vmem:[%s5 + $0x30] sm:$0xf]
      %v547 = vld [vmem:[%s5 + $0x34] sm:$0xf]
      %v548 = vld [vmem:[%s5 + $0x38] sm:$0xf]
      %v549 = vld [vmem:[%s5 + $0x3c] sm:$0xf]
      %v550 = vld [vmem:[%s6] sm:$0x1]
      %v552 = vlaneseq
      %v553 = vshrl.u32 %v552, 7
      %v554 = vsub.s32 0, %v553
      %v555 = vrot.slane %v550, %v554
      %v573 = vunpack.c.l.b16 %v534
      %v574 = vunpack.c.l.b16 %v535
      %v575 = vunpack.c.l.b16 %v536
      %v576 = vunpack.c.l.b16 %v537
      %v577 = vunpack.c.l.b16 %v538
      %v578 = vunpack.c.l.b16 %v539
      %v579 = vunpack.c.l.b16 %v540
      %v580 = vunpack.c.l.b16 %v541
      %v581 = vunpack.c.l.b16 %v542
      %v582 = vunpack.c.l.b16 %v543
      %v583 = vunpack.c.l.b16 %v544
      %v584 = vunpack.c.l.b16 %v545
      %v585 = vunpack.c.l.b16 %v546
      %v586 = vunpack.c.l.b16 %v547
      %v587 = vunpack.c.l.b16 %v548
      %v588 = vunpack.c.l.b16 %v549
      %v589 = vpack.c.b16 %v574, %v573
      %v590 = vpack.c.b16 %v576, %v575
      %v591 = vpack.c.b16 %v578, %v577
      %v592 = vpack.c.b16 %v580, %v579
      %v593 = vpack.c.b16 %v582, %v581
      %v594 = vpack.c.b16 %v584, %v583
      %v595 = vpack.c.b16 %v586, %v585
      %v596 = vpack.c.b16 %v588, %v587
      %605 = vmatprep.subr.bf16.mxu0 0
      %606 = vmatpush1.bf16.msra.mxu0 %v589
      %607 = vmatprep.subr.bf16.mxu0 0
      %608 = vmatpush1.bf16.msra.mxu0 %v590
      %609 = vmatprep.subr.bf16.mxu0 0
      %610 = vmatpush1.bf16.msra.mxu0 %v591
      %611 = vmatprep.subr.bf16.mxu0 0
      %612 = vmatpush1.bf16.msra.mxu0 %v592
      %613 = vmatprep.subr.bf16.mxu0 0
      %614 = vmatpush1.bf16.msra.mxu0 %v593
      %615 = vmatprep.subr.bf16.mxu0 0
      %616 = vmatpush1.bf16.msra.mxu0 %v594
      %617 = vmatprep.subr.bf16.mxu0 0
      %618 = vmatpush1.bf16.msra.mxu0 %v595
      %619 = vmatprep.subr.bf16.mxu0 0
      %620 = vmatpush1.bf16.msra.mxu0 %v596
      %621 = vmatprep.subr.bf16.mxu0 0
      %622 = vmatpush1.bf16.msra.mxu0 0
      %623 = vmatprep.subr.bf16.mxu0 0
      %624 = vmatpush1.bf16.msra.mxu0 0
      %625 = vmatprep.subr.bf16.mxu0 0
      %626 = vmatpush1.bf16.msra.mxu0 0
      %627 = vmatprep.subr.bf16.mxu0 0
      %628 = vmatpush1.bf16.msra.mxu0 0
      %629 = vmatprep.subr.bf16.mxu0 0
      %630 = vmatpush1.bf16.msra.mxu0 0
      %631 = vmatprep.subr.bf16.mxu0 0
      %632 = vmatpush1.bf16.msra.mxu0 0
      %633 = vmatprep.subr.bf16.mxu0 0
      %634 = vmatpush1.bf16.msra.mxu0 0
      %635 = vmatprep.subr.bf16.mxu0 0
      %636 = vmatpush1.bf16.msra.mxu0 0
      %637 = vmatprep.mubr.bf16.mxu0 0
      %638 = vmatmul.mubr.bf16.gmra.mrb[0].mxu0 %v533
      %v639 = vpop.f32.mrb[0].mxu0
      %v640 = vadd.f32 %v555, %v639
      %v641 = vpop.f32.mrb[0].mxu0
      %v642 = vpop.f32.mrb[0].mxu0
      %v643 = vadd.f32 %v555, %v642
      %v644 = vpop.f32.mrb[0].mxu0
      %645 = vdwg.mxu0
      %vm646 = vcmask 64512
      %647 = vst.msk [vmem:[%s330] sm:$0xff] %vm646, %v640
      %648 = vst.msk [vmem:[%s330 + $0x8] sm:$0xff] %vm646, %v643
      %s649 = smul.u32 2, %s23
      %p650 = scmp.lt.s32.totalorder %s22, 1
      %s651 = scalar_select %p650, %s22, 1
      %p652 = scmp.lt.s32.totalorder %s649, 1
      %s653 = scalar_select %p652, %s649, 1
      %s654 = smul.addr %s651, 2
      %s655 = sadd.s32 %s653, %s654
      %s656 = smul.addr %s655, 8
      %s657 = scalar_lea.vmem %s7, %s656
      // Predicated region
      $region49: #{denoising_forward_pallas.1} parent=47 // pred_check
        %p658 = pneg %p209
      $region50: #{denoising_forward_pallas.1} parent=47 // pred_check_branch
        %660 = sbr.rel (%p658) target = $region52
      $region51: #{denoising_forward_pallas.1} parent=47 // pred_region
        %s661 = smul.u32 2, %s23
      $region52: #{denoising_forward_pallas.1} parent=47 // pred_fallthru
        _
    $region48: #{denoising_forward_pallas.1} parent=5 // pred_fallthru
      _
    %p662 = scmp.le.s32.totalorder 2, %s13
    // Predicated region
    $region53: #{denoising_forward_pallas.1} parent=5 // pred_check
      %p663 = pneg %p662
    $region54: #{denoising_forward_pallas.1} parent=5 // pred_check_branch
      %665 = sbr.rel (%p663) target = $region56
    $region55: #{denoising_forward_pallas.1} parent=5 // pred_region
      %s666 = ssub.s32 %s13, 2
      // Predicated region
      $region57: #{denoising_forward_pallas.1} parent=55 // pred_check
        %p667 = pneg %p215
      $region58: #{denoising_forward_pallas.1} parent=55 // pred_check_branch
        %669 = sbr.rel (%p667) target = $region60
      $region59: #{denoising_forward_pallas.1} parent=55 // pred_region
        %s670 = smul.u32 2, %s25
        %p671 = scmp.lt.s32.totalorder %s24, 1
        %s672 = scalar_select %p671, %s24, 1
        %p673 = scmp.lt.s32.totalorder %s670, 1
        %s674 = scalar_select %p673, %s670, 1
        %s675 = smul.addr %s672, 2
        %s676 = sadd.s32 %s674, %s675
        %s677 = smul.addr %s676, 8
        %s678 = scalar_lea.vmem %s7, %s677
      $region60: #{denoising_forward_pallas.1} parent=55 // pred_fallthru
        _
    $region56: #{denoising_forward_pallas.1} parent=5 // pred_fallthru
      _
  $region6: #{denoising_forward_pallas.1} parent=0 // loop_footer
    %s17 = sadd.s32 1, %s13
  $region7: #{denoising_forward_pallas.1} parent=0 // loop_footer_branch
    %12 = sbr.rel target = $region3
  $region8: #{denoising_forward_pallas.1} parent=0 // loop_exit
    _

</llo_original>
